<compile_context>
chip_gen: v6e
topology: v6e:2x2x1
jax: 0.10.0
libtpu: 0.0.40
codegen_flags: <defaults>
</compile_context>

<pallas_src>
import functools

import jax
import jax.numpy as jnp
from jax.experimental import pallas as pl
from jax.experimental.pallas import tpu as pltpu


def _stacking_kernel(classes_ref, x_ref, meta_ref, wbd_ref, bbd_ref, wpbd_ref,
                     sel_ref, out_ref, *, c1, c2, cf):
    """One tile of packed rows (P samples per 128-lane row).

    classes_ref : (cf,)        i32  SMEM (scalar prefetch) — class labels
    x_ref       : (TR, 128)    f32  packed inputs, P samples x BZ lanes per row
    meta_ref    : (1, 128)     i32  lane offset within its BZ-lane sample block
    wbd_ref     : (128, 128)   f32  block-diag [W1|W2|Wf_x]^T (zero-padded blocks)
    bbd_ref     : (1, 128)     f32  per-block [b1|b2|bf|0...]
    wpbd_ref    : (128, 128)   f32  block-diag [[Wp1^T],[Wp2^T],[I_cf]] (padded)
    sel_ref     : (128, P)     f32  picks lane 0 of each sample block
    out_ref     : (TR, P)      i32  predicted class label per sample
    """
    x = x_ref[...]

    # MXU matmul #1: per sample-block -> [l1 | l2 | x@Wf_x^T + bf | 0-pad]
    z = jnp.dot(x, wbd_ref[...], preferred_element_type=jnp.float32) + bbd_ref[...]
    L = z.shape[-1]  # 128 lanes

    # Lane metadata (repeats every BZ lanes): which softmax segment / offset.
    blk_off = meta_ref[...]                       # (1, 128) int32
    in_seg1 = blk_off < c1
    is_soft = blk_off < (c1 + c2)
    seg_off = jnp.where(in_seg1, blk_off, blk_off - c1)
    seg_len = jnp.where(in_seg1, c1, c2)

    # --- segment-wise softmax over the [l1 | l2] lanes of every sample block ---
    # Per-segment max / sum via static XLU rolls gated by segment masks: the
    # rolled-in value is used only when it comes from the same (contiguous)
    # segment, so results are exact and no value from another sample leaks in.
    w = max(c1, c2)
    m = z
    for k in range(1, w):
        left = pltpu.roll(z, k, axis=1)           # left[i]  = z[i-k]
        right = pltpu.roll(z, L - k, axis=1)      # right[i] = z[i+k]
        m = jnp.where(seg_off >= k, jnp.maximum(m, left), m)
        m = jnp.where(seg_off + k < seg_len, jnp.maximum(m, right), m)
    e = jnp.exp(z - m)                            # m >= z everywhere -> e <= 1
    s = e
    for k in range(1, w):
        left = pltpu.roll(e, k, axis=1)
        right = pltpu.roll(e, L - k, axis=1)
        s = s + jnp.where(seg_off >= k, left, 0.0)
        s = s + jnp.where(seg_off + k < seg_len, right, 0.0)
    prob = e * pl.reciprocal(s, approx=False)     # exact parity with reference
    # Passthrough lanes keep x@Wf_x^T + bf; zero-pad lanes stay 0.  No lane slices.
    z2 = jnp.where(is_soft, prob, z)

    # MXU matmul #2: final-estimator logits, lane-dense (cf logits at the start
    # of every sample block; the identity block adds the passthrough term).
    logits = jnp.dot(z2, wpbd_ref[...], preferred_element_type=jnp.float32)

    # --- per-sample argmax over its cf class lanes (valid at each block start) ---
    cand = [logits] + [pltpu.roll(logits, L - c, axis=1) for c in range(1, cf)]
    mx = cand[0]
    for c in range(1, cf):
        mx = jnp.maximum(mx, cand[c])
    idx = jnp.full(logits.shape, cf - 1, jnp.int32)
    for c in range(cf - 2, -1, -1):               # first-index tie-break
        idx = jnp.where(cand[c] == mx, c, idx)

    # Compact one index per sample (pick lane 0 of each block) with a tiny matmul;
    # index values are < cf so the float round-trip is exact.
    idx_c = jnp.dot(idx.astype(jnp.float32), sel_ref[...],
                    preferred_element_type=jnp.float32).astype(jnp.int32)  # (TR, P)

    # classes[] lookup in-kernel via SMEM scalar reads (cf static selects).
    labels = jnp.zeros(idx_c.shape, jnp.int32)
    for c in range(cf):
        labels = jnp.where(idx_c == c, classes_ref[c], labels)
    out_ref[...] = labels


def stacking_classifier_predict(x, params, *, tile_rows=2048):
    """TorchStackingClassifier.predict: classes[argmax(final(transform(x)))]."""
    n, f = x.shape
    c1 = params["w1"].shape[0]
    c2 = params["w2"].shape[0]
    cf = params["wf_x"].shape[0]
    cw = c1 + c2 + cf

    # Lane packing: P samples per 128-lane row, BZ lanes per sample block.
    bw = max(f, cw)
    if bw > 128:
        raise ValueError("per-sample lane budget > 128 not supported")  # TODO(synk)
    p_pack = 1 << ((128 // bw).bit_length() - 1)   # power of two -> divides 128
    bz = 128 // p_pack
    lane_w = p_pack * bz                           # 128

    f32 = jnp.float32
    # Fused per-sample weight/bias blocks (bf folded into the passthrough bias).
    wcat = jnp.concatenate([params["w1"], params["w2"], params["wf_x"]], axis=0).T  # (f, cw)
    bcat = jnp.concatenate([params["b1"], params["b2"], params["bf"]], axis=-1)     # (1, cw)
    wp = jnp.concatenate([params["wf_p1"], params["wf_p2"]], axis=-1).T             # (c1+c2, cf)

    blk1 = jnp.zeros((bz, bz), f32).at[:f, :cw].set(wcat.astype(f32))
    wbd = jnp.kron(jnp.eye(p_pack, dtype=f32), blk1)                                # (128, 128)
    bbd = jnp.tile(jnp.pad(bcat.astype(f32), ((0, 0), (0, bz - cw))), (1, p_pack))  # (1, 128)

    blk2 = jnp.zeros((bz, bz), f32)
    blk2 = blk2.at[:c1 + c2, :cf].set(wp.astype(f32))
    blk2 = blk2.at[c1 + c2:cw, :cf].set(jnp.eye(cf, dtype=f32))   # passthrough identity
    wpbd = jnp.kron(jnp.eye(p_pack, dtype=f32), blk2)                               # (128, 128)

    sel = jnp.zeros((lane_w, p_pack), f32)
    sel = sel.at[jnp.arange(p_pack) * bz, jnp.arange(p_pack)].set(1.0)
    meta = (jnp.arange(lane_w, dtype=jnp.int32) % bz).reshape(1, lane_w)
    classes_vec = params["classes"][0].astype(jnp.int32)                            # (cf,)

    # Tile selection: big tiles (per-grid-step overhead dominates otherwise) but
    # keep >=2 tiles when possible so v7x's two TensorCores both get work.
    n_pack = -(-n // p_pack)
    half = max(8, ((n_pack + 15) // 16) * 8)
    tr = max(8, min(tile_rows, half))
    n_pack_pad = -(-n_pack // tr) * tr
    num_tiles = n_pack_pad // tr
    rows_total = n_pack_pad * p_pack

    # Pack x: pad rows, group P consecutive samples per packed row (free bitcast
    # when bz == f), zero-pad feature lanes to bz otherwise.
    xp = jnp.pad(x.astype(f32), ((0, rows_total - n), (0, 0)))
    xp = xp.reshape(n_pack_pad, p_pack, f)
    if bz != f:
        xp = jnp.pad(xp, ((0, 0), (0, 0), (0, bz - f)))
    xp = xp.reshape(n_pack_pad, lane_w)            # (n_pack_pad, 128) lane-dense

    kernel = functools.partial(_stacking_kernel, c1=c1, c2=c2, cf=cf)
    stream = lambda i, _cls: (i, 0)
    resident = lambda i, _cls: (0, 0)   # weights/metadata stay VMEM-resident

    labels = pl.pallas_call(
        kernel,
        out_shape=jax.ShapeDtypeStruct((n_pack_pad, p_pack), jnp.int32),
        grid_spec=pltpu.PrefetchScalarGridSpec(
            num_scalar_prefetch=1,                 # classes -> SMEM
            grid=(num_tiles,),
            in_specs=[
                pl.BlockSpec((tr, lane_w), stream),        # streamed packed x tiles
                pl.BlockSpec(meta.shape, resident),
                pl.BlockSpec(wbd.shape, resident),
                pl.BlockSpec(bbd.shape, resident),
                pl.BlockSpec(wpbd.shape, resident),
                pl.BlockSpec(sel.shape, resident),
            ],
            out_specs=pl.BlockSpec((tr, p_pack), stream),
        ),
        compiler_params=pltpu.CompilerParams(
            dimension_semantics=("parallel",),     # shard row tiles across TCs (v7x)
        ),
    )(classes_vec, xp, meta, wbd, bbd, wpbd, sel)

    # Padded rows/samples produce garbage labels; drop them here (keep this slice).
    return labels.reshape(-1)[:n]


def _reference_predict(x, p):
    """Pure-JAX reference mirroring TorchStackingClassifier.predict."""
    p1 = jax.nn.softmax(x @ p["w1"].T + p["b1"], axis=-1)
    p2 = jax.nn.softmax(x @ p["w2"].T + p["b2"], axis=-1)
    feats = jnp.concatenate([p1, p2, x.reshape(x.shape[0], -1)], axis=-1)
    wf = jnp.concatenate([p["wf_p1"], p["wf_p2"], p["wf_x"]], axis=-1)
    logits = feats @ wf.T + p["bf"]
    idx = jnp.argmax(logits, axis=-1)
    return p["classes"][0][idx], logits


if __name__ == "__main__":
    N, F = 256, 16        # batch (32 packed rows -> 2 tiles of 16), features
    C1 = C2 = 3           # classes per base estimator (predict_proba width, != 2)
    CF = 3                # final-estimator classes

    key = jax.random.PRNGKey(0)
    k = jax.random.split(key, 9)
    params = {
        "w1":    0.5 * jax.random.normal(k[0], (C1, F), jnp.float32),
        "b1":    0.1 * jax.random.normal(k[1], (1, C1), jnp.float32),
        "w2":    0.5 * jax.random.normal(k[2], (C2, F), jnp.float32),
        "b2":    0.1 * jax.random.normal(k[3], (1, C2), jnp.float32),
        "wf_p1": 0.5 * jax.random.normal(k[4], (CF, C1), jnp.float32),
        "wf_p2": 0.5 * jax.random.normal(k[5], (CF, C2), jnp.float32),
        "wf_x":  0.5 * jax.random.normal(k[6], (CF, F), jnp.float32),
        "bf":    0.1 * jax.random.normal(k[7], (1, CF), jnp.float32),
        "classes": jnp.array([[7, 11, 42]], dtype=jnp.int32),   # label buffer
    }
    x = jax.random.normal(k[8], (N, F), jnp.float32)

    pred = jax.block_until_ready(stacking_classifier_predict(x, params))
    ref_labels, ref_logits = _reference_predict(x, params)

    assert pred.shape == (N,) and pred.dtype == jnp.int32
    # Exact match except at genuine near-ties of the reference logits, where
    # matmul summation-order differences could legitimately flip the argmax.
    top2 = jnp.sort(ref_logits, axis=-1)
    near_tie = (top2[:, -1] - top2[:, -2]) < 1e-3
    ok = (pred == ref_labels.astype(jnp.int32)) | near_tie
    assert bool(jnp.all(ok))
    print("KERNEL_OK")
</pallas_src>

<mosaic_0001>
module attributes {stable_mosaic.version = 11 : i64} {
  func.func @_stacking_kernel(%arg0: i32, %arg1: memref<3xi32, #tpu.memory_space<smem>>, %arg2: memref<16x128xf32, #tpu.memory_space<vmem>>, %arg3: memref<1x128xi32, #tpu.memory_space<vmem>>, %arg4: memref<128x128xf32, #tpu.memory_space<vmem>>, %arg5: memref<1x128xf32, #tpu.memory_space<vmem>>, %arg6: memref<128x128xf32, #tpu.memory_space<vmem>>, %arg7: memref<128x8xf32, #tpu.memory_space<vmem>>, %arg8: memref<16x8xi32, #tpu.memory_space<vmem>>) attributes {dimension_semantics = [#tpu.dimension_semantics<parallel>], iteration_bounds = array<i64: 2>, scalar_prefetch = 1 : i64, scratch_operands = 0 : i64, tpu.core_type = #tpu.core_type<tc>, window_params = [{transform_indices = @transform_0, window_bounds = array<i64: 16, 128>}, {pipeline_mode = #tpu.pipeline_mode<synchronous>, transform_indices = @transform_1, window_bounds = array<i64: 1, 128>}, {pipeline_mode = #tpu.pipeline_mode<synchronous>, transform_indices = @transform_2, window_bounds = array<i64: 128, 128>}, {pipeline_mode = #tpu.pipeline_mode<synchronous>, transform_indices = @transform_3, window_bounds = array<i64: 1, 128>}, {pipeline_mode = #tpu.pipeline_mode<synchronous>, transform_indices = @transform_4, window_bounds = array<i64: 128, 128>}, {pipeline_mode = #tpu.pipeline_mode<synchronous>, transform_indices = @transform_5, window_bounds = array<i64: 128, 8>}, {transform_indices = @transform_6, window_bounds = array<i64: 16, 8>}]} {
    %c0 = arith.constant 0 : index
    %c0_0 = arith.constant 0 : index
    %0 = vector.load %arg2[%c0, %c0_0] : memref<16x128xf32, #tpu.memory_space<vmem>>, vector<16x128xf32>
    %c0_1 = arith.constant 0 : index
    %c0_2 = arith.constant 0 : index
    %1 = vector.load %arg4[%c0_1, %c0_2] : memref<128x128xf32, #tpu.memory_space<vmem>>, vector<128x128xf32>
    %cst = arith.constant dense<0.000000e+00> : vector<16x128xf32>
    %2 = tpu.matmul %0, %1, %cst {dimension_numbers = #tpu.dot_dimension_numbers<[1], [0], [0], [1], [0, 0, 1, 1], [], []>} : vector<16x128xf32>, vector<128x128xf32>, vector<16x128xf32> -> vector<16x128xf32>
    %c0_3 = arith.constant 0 : index
    %c0_4 = arith.constant 0 : index
    %3 = vector.load %arg5[%c0_3, %c0_4] : memref<1x128xf32, #tpu.memory_space<vmem>>, vector<1x128xf32>
    %4 = vector.broadcast %3 : vector<1x128xf32> to vector<16x128xf32>
    %5 = arith.addf %2, %4 : vector<16x128xf32>
    %c0_5 = arith.constant 0 : index
    %c0_6 = arith.constant 0 : index
    %6 = vector.load %arg3[%c0_5, %c0_6] : memref<1x128xi32, #tpu.memory_space<vmem>>, vector<1x128xi32>
    %c3_i32 = arith.constant 3 : i32
    %7 = vector.broadcast %c3_i32 : i32 to vector<1x128xi32>
    %8 = arith.cmpi slt, %6, %7 : vector<1x128xi32>
    %c6_i32 = arith.constant 6 : i32
    %9 = vector.broadcast %c6_i32 : i32 to vector<1x128xi32>
    %10 = arith.cmpi slt, %6, %9 : vector<1x128xi32>
    %c3_i32_7 = arith.constant 3 : i32
    %11 = vector.broadcast %c3_i32_7 : i32 to vector<1x128xi32>
    %12 = arith.subi %6, %11 : vector<1x128xi32>
    %13 = arith.select %8, %6, %12 : vector<1x128xi1>, vector<1x128xi32>
    %c3_i32_8 = arith.constant 3 : i32
    %c3_i32_9 = arith.constant 3 : i32
    %14 = vector.broadcast %c3_i32_8 : i32 to vector<1x128xi32>
    %15 = vector.broadcast %c3_i32_9 : i32 to vector<1x128xi32>
    %16 = arith.select %8, %14, %15 : vector<1x128xi1>, vector<1x128xi32>
    %c1_i32 = arith.constant 1 : i32
    %17 = tpu.dynamic_rotate %5 by %c1_i32 dim 1 : vector<16x128xf32>, i32 -> vector<16x128xf32>
    %c127_i32 = arith.constant 127 : i32
    %18 = tpu.dynamic_rotate %5 by %c127_i32 dim 1 : vector<16x128xf32>, i32 -> vector<16x128xf32>
    %c1_i32_10 = arith.constant 1 : i32
    %19 = vector.broadcast %c1_i32_10 : i32 to vector<1x128xi32>
    %20 = arith.cmpi sge, %13, %19 : vector<1x128xi32>
    %21 = arith.maximumf %5, %17 : vector<16x128xf32>
    %22 = vector.shape_cast %20 : vector<1x128xi1> to vector<1x128xi1>
    %23 = vector.broadcast %22 : vector<1x128xi1> to vector<16x128xi1>
    %24 = arith.select %23, %21, %5 : vector<16x128xi1>, vector<16x128xf32>
    %c1_i32_11 = arith.constant 1 : i32
    %25 = vector.broadcast %c1_i32_11 : i32 to vector<1x128xi32>
    %26 = arith.addi %13, %25 : vector<1x128xi32>
    %27 = arith.cmpi slt, %26, %16 : vector<1x128xi32>
    %28 = arith.maximumf %24, %18 : vector<16x128xf32>
    %29 = vector.shape_cast %27 : vector<1x128xi1> to vector<1x128xi1>
    %30 = vector.broadcast %29 : vector<1x128xi1> to vector<16x128xi1>
    %31 = arith.select %30, %28, %24 : vector<16x128xi1>, vector<16x128xf32>
    %c2_i32 = arith.constant 2 : i32
    %32 = tpu.dynamic_rotate %5 by %c2_i32 dim 1 : vector<16x128xf32>, i32 -> vector<16x128xf32>
    %c126_i32 = arith.constant 126 : i32
    %33 = tpu.dynamic_rotate %5 by %c126_i32 dim 1 : vector<16x128xf32>, i32 -> vector<16x128xf32>
    %c2_i32_12 = arith.constant 2 : i32
    %34 = vector.broadcast %c2_i32_12 : i32 to vector<1x128xi32>
    %35 = arith.cmpi sge, %13, %34 : vector<1x128xi32>
    %36 = arith.maximumf %31, %32 : vector<16x128xf32>
    %37 = vector.shape_cast %35 : vector<1x128xi1> to vector<1x128xi1>
    %38 = vector.broadcast %37 : vector<1x128xi1> to vector<16x128xi1>
    %39 = arith.select %38, %36, %31 : vector<16x128xi1>, vector<16x128xf32>
    %c2_i32_13 = arith.constant 2 : i32
    %40 = vector.broadcast %c2_i32_13 : i32 to vector<1x128xi32>
    %41 = arith.addi %13, %40 : vector<1x128xi32>
    %42 = arith.cmpi slt, %41, %16 : vector<1x128xi32>
    %43 = arith.maximumf %39, %33 : vector<16x128xf32>
    %44 = vector.shape_cast %42 : vector<1x128xi1> to vector<1x128xi1>
    %45 = vector.broadcast %44 : vector<1x128xi1> to vector<16x128xi1>
    %46 = arith.select %45, %43, %39 : vector<16x128xi1>, vector<16x128xf32>
    %47 = arith.subf %5, %46 : vector<16x128xf32>
    %48 = math.exp %47 : vector<16x128xf32>
    %c1_i32_14 = arith.constant 1 : i32
    %49 = tpu.dynamic_rotate %48 by %c1_i32_14 dim 1 : vector<16x128xf32>, i32 -> vector<16x128xf32>
    %c127_i32_15 = arith.constant 127 : i32
    %50 = tpu.dynamic_rotate %48 by %c127_i32_15 dim 1 : vector<16x128xf32>, i32 -> vector<16x128xf32>
    %c1_i32_16 = arith.constant 1 : i32
    %51 = vector.broadcast %c1_i32_16 : i32 to vector<1x128xi32>
    %52 = arith.cmpi sge, %13, %51 : vector<1x128xi32>
    %cst_17 = arith.constant 0.000000e+00 : f32
    %53 = vector.shape_cast %52 : vector<1x128xi1> to vector<1x128xi1>
    %54 = vector.broadcast %53 : vector<1x128xi1> to vector<16x128xi1>
    %55 = vector.broadcast %cst_17 : f32 to vector<16x128xf32>
    %56 = arith.select %54, %49, %55 : vector<16x128xi1>, vector<16x128xf32>
    %57 = arith.addf %48, %56 : vector<16x128xf32>
    %c1_i32_18 = arith.constant 1 : i32
    %58 = vector.broadcast %c1_i32_18 : i32 to vector<1x128xi32>
    %59 = arith.addi %13, %58 : vector<1x128xi32>
    %60 = arith.cmpi slt, %59, %16 : vector<1x128xi32>
    %cst_19 = arith.constant 0.000000e+00 : f32
    %61 = vector.shape_cast %60 : vector<1x128xi1> to vector<1x128xi1>
    %62 = vector.broadcast %61 : vector<1x128xi1> to vector<16x128xi1>
    %63 = vector.broadcast %cst_19 : f32 to vector<16x128xf32>
    %64 = arith.select %62, %50, %63 : vector<16x128xi1>, vector<16x128xf32>
    %65 = arith.addf %57, %64 : vector<16x128xf32>
    %c2_i32_20 = arith.constant 2 : i32
    %66 = tpu.dynamic_rotate %48 by %c2_i32_20 dim 1 : vector<16x128xf32>, i32 -> vector<16x128xf32>
    %c126_i32_21 = arith.constant 126 : i32
    %67 = tpu.dynamic_rotate %48 by %c126_i32_21 dim 1 : vector<16x128xf32>, i32 -> vector<16x128xf32>
    %c2_i32_22 = arith.constant 2 : i32
    %68 = vector.broadcast %c2_i32_22 : i32 to vector<1x128xi32>
    %69 = arith.cmpi sge, %13, %68 : vector<1x128xi32>
    %cst_23 = arith.constant 0.000000e+00 : f32
    %70 = vector.shape_cast %69 : vector<1x128xi1> to vector<1x128xi1>
    %71 = vector.broadcast %70 : vector<1x128xi1> to vector<16x128xi1>
    %72 = vector.broadcast %cst_23 : f32 to vector<16x128xf32>
    %73 = arith.select %71, %66, %72 : vector<16x128xi1>, vector<16x128xf32>
    %74 = arith.addf %65, %73 : vector<16x128xf32>
    %c2_i32_24 = arith.constant 2 : i32
    %75 = vector.broadcast %c2_i32_24 : i32 to vector<1x128xi32>
    %76 = arith.addi %13, %75 : vector<1x128xi32>
    %77 = arith.cmpi slt, %76, %16 : vector<1x128xi32>
    %cst_25 = arith.constant 0.000000e+00 : f32
    %78 = vector.shape_cast %77 : vector<1x128xi1> to vector<1x128xi1>
    %79 = vector.broadcast %78 : vector<1x128xi1> to vector<16x128xi1>
    %80 = vector.broadcast %cst_25 : f32 to vector<16x128xf32>
    %81 = arith.select %79, %67, %80 : vector<16x128xi1>, vector<16x128xf32>
    %82 = arith.addf %74, %81 : vector<16x128xf32>
    %83 = tpu.reciprocal %82 : vector<16x128xf32> -> vector<16x128xf32>
    %84 = arith.mulf %48, %83 : vector<16x128xf32>
    %85 = vector.shape_cast %10 : vector<1x128xi1> to vector<1x128xi1>
    %86 = vector.broadcast %85 : vector<1x128xi1> to vector<16x128xi1>
    %87 = arith.select %86, %84, %5 : vector<16x128xi1>, vector<16x128xf32>
    %c0_26 = arith.constant 0 : index
    %c0_27 = arith.constant 0 : index
    %88 = vector.load %arg6[%c0_26, %c0_27] : memref<128x128xf32, #tpu.memory_space<vmem>>, vector<128x128xf32>
    %cst_28 = arith.constant dense<0.000000e+00> : vector<16x128xf32>
    %89 = tpu.matmul %87, %88, %cst_28 {dimension_numbers = #tpu.dot_dimension_numbers<[1], [0], [0], [1], [0, 0, 1, 1], [], []>} : vector<16x128xf32>, vector<128x128xf32>, vector<16x128xf32> -> vector<16x128xf32>
    %c127_i32_29 = arith.constant 127 : i32
    %90 = tpu.dynamic_rotate %89 by %c127_i32_29 dim 1 : vector<16x128xf32>, i32 -> vector<16x128xf32>
    %c126_i32_30 = arith.constant 126 : i32
    %91 = tpu.dynamic_rotate %89 by %c126_i32_30 dim 1 : vector<16x128xf32>, i32 -> vector<16x128xf32>
    %92 = arith.maximumf %89, %90 : vector<16x128xf32>
    %93 = arith.maximumf %92, %91 : vector<16x128xf32>
    %c2_i32_31 = arith.constant 2 : i32
    %94 = vector.broadcast %c2_i32_31 : i32 to vector<16x128xi32>
    %95 = arith.cmpf oeq, %90, %93 : vector<16x128xf32>
    %c1_i32_32 = arith.constant 1 : i32
    %96 = vector.broadcast %c1_i32_32 : i32 to vector<16x128xi32>
    %97 = arith.select %95, %96, %94 : vector<16x128xi1>, vector<16x128xi32>
    %98 = arith.cmpf oeq, %89, %93 : vector<16x128xf32>
    %c0_i32 = arith.constant 0 : i32
    %99 = vector.broadcast %c0_i32 : i32 to vector<16x128xi32>
    %100 = arith.select %98, %99, %97 : vector<16x128xi1>, vector<16x128xi32>
    %101 = arith.sitofp %100 : vector<16x128xi32> to vector<16x128xf32>
    %c0_33 = arith.constant 0 : index
    %c0_34 = arith.constant 0 : index
    %102 = vector.load %arg7[%c0_33, %c0_34] : memref<128x8xf32, #tpu.memory_space<vmem>>, vector<128x8xf32>
    %cst_35 = arith.constant dense<0.000000e+00> : vector<16x8xf32>
    %103 = tpu.matmul %101, %102, %cst_35 {dimension_numbers = #tpu.dot_dimension_numbers<[1], [0], [0], [1], [0, 0, 1, 1], [], []>} : vector<16x128xf32>, vector<128x8xf32>, vector<16x8xf32> -> vector<16x8xf32>
    %104 = arith.fptosi %103 : vector<16x8xf32> to vector<16x8xi32>
    %c0_i32_36 = arith.constant 0 : i32
    %105 = vector.broadcast %c0_i32_36 : i32 to vector<16x8xi32>
    %c0_i32_37 = arith.constant 0 : i32
    %106 = vector.broadcast %c0_i32_37 : i32 to vector<16x8xi32>
    %107 = arith.cmpi eq, %104, %106 : vector<16x8xi32>
    %c0_38 = arith.constant 0 : index
    %108 = memref.load %arg1[%c0_38] : memref<3xi32, #tpu.memory_space<smem>>
    %109 = vector.broadcast %108 : i32 to vector<16x8xi32>
    %110 = arith.select %107, %109, %105 : vector<16x8xi1>, vector<16x8xi32>
    %c1_i32_39 = arith.constant 1 : i32
    %111 = vector.broadcast %c1_i32_39 : i32 to vector<16x8xi32>
    %112 = arith.cmpi eq, %104, %111 : vector<16x8xi32>
    %c1 = arith.constant 1 : index
    %113 = memref.load %arg1[%c1] : memref<3xi32, #tpu.memory_space<smem>>
    %114 = vector.broadcast %113 : i32 to vector<16x8xi32>
    %115 = arith.select %112, %114, %110 : vector<16x8xi1>, vector<16x8xi32>
    %c2_i32_40 = arith.constant 2 : i32
    %116 = vector.broadcast %c2_i32_40 : i32 to vector<16x8xi32>
    %117 = arith.cmpi eq, %104, %116 : vector<16x8xi32>
    %c2 = arith.constant 2 : index
    %118 = memref.load %arg1[%c2] : memref<3xi32, #tpu.memory_space<smem>>
    %119 = vector.broadcast %118 : i32 to vector<16x8xi32>
    %120 = arith.select %117, %119, %115 : vector<16x8xi1>, vector<16x8xi32>
    %c0_41 = arith.constant 0 : index
    %c0_42 = arith.constant 0 : index
    %121 = vector.load %arg8[%c0_41, %c0_42] : memref<16x8xi32, #tpu.memory_space<vmem>>, vector<16x8xi32>
    tpu.vector_store %arg8[%c0_41, %c0_42], %120 {strides = array<i32>} : memref<16x8xi32, #tpu.memory_space<vmem>>, vector<16x8xi32>,
    return
  }
  func.func @transform_0(%arg0: i32, %arg1: memref<3xi32, #tpu.memory_space<smem>>) -> (i32, i32) {
    %c0_i32 = arith.constant 0 : i32
    %c0_i32_0 = arith.constant 0 : i32
    return %arg0, %c0_i32 : i32, i32
  }
  func.func @transform_1(%arg0: i32, %arg1: memref<3xi32, #tpu.memory_space<smem>>) -> (i32, i32) {
    %c0_i32 = arith.constant 0 : i32
    %c0_i32_0 = arith.constant 0 : i32
    %c0_i32_1 = arith.constant 0 : i32
    return %c0_i32, %c0_i32_0 : i32, i32
  }
  func.func @transform_2(%arg0: i32, %arg1: memref<3xi32, #tpu.memory_space<smem>>) -> (i32, i32) {
    %c0_i32 = arith.constant 0 : i32
    %c0_i32_0 = arith.constant 0 : i32
    %c0_i32_1 = arith.constant 0 : i32
    return %c0_i32, %c0_i32_0 : i32, i32
  }
  func.func @transform_3(%arg0: i32, %arg1: memref<3xi32, #tpu.memory_space<smem>>) -> (i32, i32) {
    %c0_i32 = arith.constant 0 : i32
    %c0_i32_0 = arith.constant 0 : i32
    %c0_i32_1 = arith.constant 0 : i32
    return %c0_i32, %c0_i32_0 : i32, i32
  }
  func.func @transform_4(%arg0: i32, %arg1: memref<3xi32, #tpu.memory_space<smem>>) -> (i32, i32) {
    %c0_i32 = arith.constant 0 : i32
    %c0_i32_0 = arith.constant 0 : i32
    %c0_i32_1 = arith.constant 0 : i32
    return %c0_i32, %c0_i32_0 : i32, i32
  }
  func.func @transform_5(%arg0: i32, %arg1: memref<3xi32, #tpu.memory_space<smem>>) -> (i32, i32) {
    %c0_i32 = arith.constant 0 : i32
    %c0_i32_0 = arith.constant 0 : i32
    %c0_i32_1 = arith.constant 0 : i32
    return %c0_i32, %c0_i32_0 : i32, i32
  }
  func.func @transform_6(%arg0: i32, %arg1: memref<3xi32, #tpu.memory_space<smem>>) -> (i32, i32) {
    %c0_i32 = arith.constant 0 : i32
    %c0_i32_0 = arith.constant 0 : i32
    return %arg0, %c0_i32 : i32, i32
  }
}

</mosaic_0001>

<llo_original>
// kernel: tpu_custom_call.1
$region0: #{tpu_custom_call.1}
  #allocation0 [shape = 'u32[]', space=smem, size = 0x4, offset = 0x4, fixed_abs, tag = 'smem constant byte address 0x4 - core index']
  #allocation1 [shape = 'u32[144,128]{1,0:T(1,128)}', space=vmem, size = 0x12000, scoped, tag = 'internal scratch']
  #allocation2 [shape = 's32[1]{0}', space=sflag, size = 0x4, scoped, tag = 'scoped memory for tpu_custom_call.1']
  #allocation3 [shape = 'u8[512]{0}', space=smem, size = 0x200, scoped, tag = 'prefetched SMEM operand 0']
  %s0 = inlined_call_operand.vmem [shape: s32[3], index: 0, kind: input, shape index: {}]
  %s1 = inlined_call_operand.hbm [shape: f32[32,128], index: 1, kind: input, shape index: {}]
  %s2 = inlined_call_operand.vmem [shape: s32[1,128], index: 2, kind: input, shape index: {}]
  %s3 = inlined_call_operand.vmem [shape: f32[128,128], index: 3, kind: input, shape index: {}]
  %s4 = inlined_call_operand.vmem [shape: f32[1,128], index: 4, kind: input, shape index: {}]
  %s5 = inlined_call_operand.hbm [shape: f32[128,128], index: 5, kind: input, shape index: {}]
  %s6 = inlined_call_operand.vmem [shape: f32[128,8], index: 6, kind: input, shape index: {}]
  %s7 = inlined_call_operand.vmem [shape: s32[32,8], index: 7, kind: output, shape index: {}]
  %s8 = sld [smem:[#allocation0]]
  $region65: #{tpu_custom_call.1} parent=0
    _
  %s10 = ssub.s32 1, %s8
  %s11 = scalar_select 0, %s10, %s8
  %s12 = sshll.u32 %s0, 4
  %s13 = int_to_ptr.vmem [resolvable:$true] %s12
  %15 = dma.vmem_to_smem %s13, 16, [#allocation3], [#allocation2]
  %16 = dma.done [#allocation2], 16
  %17 = sfence
  $region1: #{tpu_custom_call.1} parent=0
    #allocation4 [shape = 'u8[16384]{0}', space=vmem, size = 0x4000, scoped, tag = 'input window, operand 1']
    #allocation5 [shape = 's32[2]{0}', space=sflag, size = 0x8, scoped, tag = 'scoped memory for tpu_custom_call.1']
    #allocation6 [shape = 'u8[65536]{0}', space=vmem, size = 0x10000, scoped, tag = 'input window, operand 5, single buffered']
    #allocation7 [shape = 's32[1]{0}', space=sflag, size = 0x4, scoped, tag = 'scoped memory for tpu_custom_call.1']
    %18 = vsyncpa [#allocation5], 0
    %s19 = scalar_lea.sflag [#allocation5], 1
    %20 = vsyncpa %s19, 0
    %21 = vsyncpa [#allocation7], 0
    loop: start=0, step=1, limit=4
    $region2: #{tpu_custom_call.1} parent=1 // loop_pre_header
      _
    $region3: #{tpu_custom_call.1} parent=1 // loop_header
      %s23 = sphi 0, %s27
      %p24 = scmp.ge.s32.totalorder %s23, 4
      %s33 = sphi 0, %s35
      %s36 = sphi 0, %s33
      %s37 = sphi 0, %s36
      %s53 = sphi 0, %s37
      %s57 = sphi 0, %s57
      %s59 = sphi 0, %s57
      %s60 = sphi 0, %s59
      %s74 = sphi 0, %s60
      %s78 = sphi 0, %s78
      %s80 = sphi 0, %s78
      %s81 = sphi 0, %s80
      %s95 = sphi 0, %s81
      %s99 = sphi 0, %s99
      %s101 = sphi 0, %s99
      %s102 = sphi 0, %s101
      %s116 = sphi 0, %s102
      %s120 = sphi 0, %s120
      %s122 = sphi 0, %s120
      %s123 = sphi 0, %s122
      %s137 = sphi 0, %s123
      %s141 = sphi 0, %s141
      %s143 = sphi 0, %s141
      %s144 = sphi 0, %s143
      %s158 = sphi 0, %s144
      %s164 = sphi 0, %s166
      %s167 = sphi 0, %s164
      %s168 = sphi 0, %s167
      %s184 = sphi 0, %s168
    $region4: #{tpu_custom_call.1} parent=1 // loop_header_branch
      %26 = sbr.rel (%p24) target = $region8
    $region5: #{tpu_custom_call.1} parent=1 // loop_body
      %s28 = ssub.s32 %s23, 1
      %s29 = ssub.s32 %s23, 2
      %s30 = sadd.s32 %s23, 1
      %s31 = ssub.s32 %s23, %s30
      %p32 = scmp.eq.s32.totalorder %s31, 0
      %s34 = sadd.s32 %s33, 1
      %s35 = scalar_select %p32, %s33, %s34
      %p38 = pneg %p32
      %p39 = scmp.eq.s32.totalorder %s23, 1
      %p40 = por %p38, %p39
      %p41 = scmp.ne.s32.totalorder %s33, %s36
      %p42 = scmp.eq.s32.totalorder %s23, 0
      %p43 = por %p41, %p42
      %p44 = scmp.ne.s32.totalorder %s33, %s36
      %p45 = scmp.eq.s32.totalorder %s28, 1
      %p46 = por %p44, %p45
      %p47 = scmp.ne.s32.totalorder %s36, %s37
      %p48 = scmp.eq.s32.totalorder %s28, 0
      %p49 = por %p47, %p48
      %p50 = scmp.ne.s32.totalorder %s36, %s37
      %p51 = scmp.eq.s32.totalorder %s29, 1
      %p52 = por %p50, %p51
      %p54 = scmp.ne.s32.totalorder %s37, %s53
      %p55 = scmp.eq.s32.totalorder %s29, 0
      %p56 = por %p54, %p55
      %s58 = sadd.s32 %s57, 1
      %p61 = scmp.eq.s32.totalorder %s23, 1
      %p62 = scmp.ne.s32.totalorder %s57, %s59
      %p63 = scmp.eq.s32.totalorder %s23, 0
      %p64 = por %p62, %p63
      %p65 = scmp.ne.s32.totalorder %s57, %s59
      %p66 = scmp.eq.s32.totalorder %s28, 1
      %p67 = por %p65, %p66
      %p68 = scmp.ne.s32.totalorder %s59, %s60
      %p69 = scmp.eq.s32.totalorder %s28, 0
      %p70 = por %p68, %p69
      %p71 = scmp.ne.s32.totalorder %s59, %s60
      %p72 = scmp.eq.s32.totalorder %s29, 1
      %p73 = por %p71, %p72
      %p75 = scmp.ne.s32.totalorder %s60, %s74
      %p76 = scmp.eq.s32.totalorder %s29, 0
      %p77 = por %p75, %p76
      %s79 = sadd.s32 %s78, 1
      %p82 = scmp.eq.s32.totalorder %s23, 1
      %p83 = scmp.ne.s32.totalorder %s78, %s80
      %p84 = scmp.eq.s32.totalorder %s23, 0
      %p85 = por %p83, %p84
      %p86 = scmp.ne.s32.totalorder %s78, %s80
      %p87 = scmp.eq.s32.totalorder %s28, 1
      %p88 = por %p86, %p87
      %p89 = scmp.ne.s32.totalorder %s80, %s81
      %p90 = scmp.eq.s32.totalorder %s28, 0
      %p91 = por %p89, %p90
      %p92 = scmp.ne.s32.totalorder %s80, %s81
      %p93 = scmp.eq.s32.totalorder %s29, 1
      %p94 = por %p92, %p93
      %p96 = scmp.ne.s32.totalorder %s81, %s95
      %p97 = scmp.eq.s32.totalorder %s29, 0
      %p98 = por %p96, %p97
      %s100 = sadd.s32 %s99, 1
      %p103 = scmp.eq.s32.totalorder %s23, 1
      %p104 = scmp.ne.s32.totalorder %s99, %s101
      %p105 = scmp.eq.s32.totalorder %s23, 0
      %p106 = por %p104, %p105
      %p107 = scmp.ne.s32.totalorder %s99, %s101
      %p108 = scmp.eq.s32.totalorder %s28, 1
      %p109 = por %p107, %p108
      %p110 = scmp.ne.s32.totalorder %s101, %s102
      %p111 = scmp.eq.s32.totalorder %s28, 0
      %p112 = por %p110, %p111
      %p113 = scmp.ne.s32.totalorder %s101, %s102
      %p114 = scmp.eq.s32.totalorder %s29, 1
      %p115 = por %p113, %p114
      %p117 = scmp.ne.s32.totalorder %s102, %s116
      %p118 = scmp.eq.s32.totalorder %s29, 0
      %p119 = por %p117, %p118
      %s121 = sadd.s32 %s120, 1
      %p124 = scmp.eq.s32.totalorder %s23, 1
      %p125 = scmp.ne.s32.totalorder %s120, %s122
      %p126 = scmp.eq.s32.totalorder %s23, 0
      %p127 = por %p125, %p126
      %p128 = scmp.ne.s32.totalorder %s120, %s122
      %p129 = scmp.eq.s32.totalorder %s28, 1
      %p130 = por %p128, %p129
      %p131 = scmp.ne.s32.totalorder %s122, %s123
      %p132 = scmp.eq.s32.totalorder %s28, 0
      %p133 = por %p131, %p132
      %p134 = scmp.ne.s32.totalorder %s122, %s123
      %p135 = scmp.eq.s32.totalorder %s29, 1
      %p136 = por %p134, %p135
      %p138 = scmp.ne.s32.totalorder %s123, %s137
      %p139 = scmp.eq.s32.totalorder %s29, 0
      %p140 = por %p138, %p139
      %s142 = sadd.s32 %s141, 1
      %p145 = scmp.eq.s32.totalorder %s23, 1
      %p146 = scmp.ne.s32.totalorder %s141, %s143
      %p147 = scmp.eq.s32.totalorder %s23, 0
      %p148 = por %p146, %p147
      %p149 = scmp.ne.s32.totalorder %s141, %s143
      %p150 = scmp.eq.s32.totalorder %s28, 1
      %p151 = por %p149, %p150
      %p152 = scmp.ne.s32.totalorder %s143, %s144
      %p153 = scmp.eq.s32.totalorder %s28, 0
      %p154 = por %p152, %p153
      %p155 = scmp.ne.s32.totalorder %s143, %s144
      %p156 = scmp.eq.s32.totalorder %s29, 1
      %p157 = por %p155, %p156
      %p159 = scmp.ne.s32.totalorder %s144, %s158
      %p160 = scmp.eq.s32.totalorder %s29, 0
      %p161 = por %p159, %p160
      %s162 = ssub.s32 %s23, %s30
      %p163 = scmp.eq.s32.totalorder %s162, 0
      %s165 = sadd.s32 %s164, 1
      %s166 = scalar_select %p163, %s164, %s165
      %p169 = pneg %p163
      %p170 = scmp.eq.s32.totalorder %s23, 1
      %p171 = por %p169, %p170
      %p172 = scmp.ne.s32.totalorder %s164, %s167
      %p173 = scmp.eq.s32.totalorder %s23, 0
      %p174 = por %p172, %p173
      %p175 = scmp.ne.s32.totalorder %s164, %s167
      %p176 = scmp.eq.s32.totalorder %s28, 1
      %p177 = por %p175, %p176
      %p178 = scmp.ne.s32.totalorder %s167, %s168
      %p179 = scmp.eq.s32.totalorder %s28, 0
      %p180 = por %p178, %p179
      %p181 = scmp.ne.s32.totalorder %s167, %s168
      %p182 = scmp.eq.s32.totalorder %s29, 1
      %p183 = por %p181, %p182
      %p185 = scmp.ne.s32.totalorder %s168, %s184
      %p186 = scmp.eq.s32.totalorder %s29, 0
      %p187 = por %p185, %p186
      %p188 = scmp.le.s32.totalorder 1, %s23
      %p189 = scmp.lt.s32.totalorder %s23, 3
      %p190 = pnand %p188, %p189
      %p191 = pneg %p190
      // Predicated region
      $region9: #{tpu_custom_call.1} parent=5 // pred_check
        _
      $region10: #{tpu_custom_call.1} parent=5 // pred_check_branch
        %193 = sbr.rel (%p190) target = $region12
      $region11: #{tpu_custom_call.1} parent=5 // pred_region
        %s194 = ssub.s32 %s23, 1
        // Predicated region
        $region13: #{tpu_custom_call.1} parent=11 // pred_check
          %p195 = pneg %p70
        $region14: #{tpu_custom_call.1} parent=11 // pred_check_branch
          %197 = sbr.rel (%p195) target = $region16
        $region15: #{tpu_custom_call.1} parent=11 // pred_region
          _
        $region16: #{tpu_custom_call.1} parent=11 // pred_fallthru
          _
        // Predicated region
        $region17: #{tpu_custom_call.1} parent=11 // pred_check
          %p198 = pneg %p91
        $region18: #{tpu_custom_call.1} parent=11 // pred_check_branch
          %200 = sbr.rel (%p198) target = $region20
        $region19: #{tpu_custom_call.1} parent=11 // pred_region
          _
        $region20: #{tpu_custom_call.1} parent=11 // pred_fallthru
          _
        // Predicated region
        $region21: #{tpu_custom_call.1} parent=11 // pred_check
          %p201 = pneg %p112
        $region22: #{tpu_custom_call.1} parent=11 // pred_check_branch
          %203 = sbr.rel (%p201) target = $region24
        $region23: #{tpu_custom_call.1} parent=11 // pred_region
          _
        $region24: #{tpu_custom_call.1} parent=11 // pred_fallthru
          _
        // Predicated region
        $region25: #{tpu_custom_call.1} parent=11 // pred_check
          %p204 = pneg %p133
        $region26: #{tpu_custom_call.1} parent=11 // pred_check_branch
          %206 = sbr.rel (%p204) target = $region28
        $region27: #{tpu_custom_call.1} parent=11 // pred_region
          %s208 = ssub.s32 2048, 2048
          %209 = vsyncadd [#allocation7], %s208
          %s210 = sshll.u32 [#allocation6], 4
          %s211 = int_to_ptr.vmem [resolvable:$true] %s210
          %216 = dma.hbm_to_vmem [thread:$0]  %s5, 2048, %s211, [#allocation7], 128, 128, 8
        $region28: #{tpu_custom_call.1} parent=11 // pred_fallthru
          _
        // Predicated region
        $region29: #{tpu_custom_call.1} parent=11 // pred_check
          %p217 = pneg %p154
        $region30: #{tpu_custom_call.1} parent=11 // pred_check_branch
          %219 = sbr.rel (%p217) target = $region32
        $region31: #{tpu_custom_call.1} parent=11 // pred_region
          _
        $region32: #{tpu_custom_call.1} parent=11 // pred_fallthru
          _
      $region12: #{tpu_custom_call.1} parent=5 // pred_fallthru
        _
      %p220 = scmp.lt.s32.totalorder %s23, 2
      // Predicated region
      $region33: #{tpu_custom_call.1} parent=5 // pred_check
        %p221 = pneg %p220
      $region34: #{tpu_custom_call.1} parent=5 // pred_check_branch
        %223 = sbr.rel (%p221) target = $region36
      $region35: #{tpu_custom_call.1} parent=5 // pred_region
        // Predicated region
        $region37: #{tpu_custom_call.1} parent=35 // pred_check
          %p224 = pneg %p43
        $region38: #{tpu_custom_call.1} parent=35 // pred_check_branch
          %226 = sbr.rel (%p224) target = $region40
        $region39: #{tpu_custom_call.1} parent=35 // pred_region
          %s227 = sand.u32 %s33, 1
          %s228 = scalar_lea.sflag [#allocation5], %s227
          %s229 = sand.u32 %s33, 1
          %s230 = smul.addr %s229, 16
          %s231 = scalar_lea.vmem [#allocation4], %s230
          %s232 = smul.u32 2, %s23
          %s234 = ssub.s32 256, 256
          %235 = vsyncadd %s228, %s234
          %s236 = smul.addr %s232, 128
          %s237 = scalar_lea.hbm %s1, %s236
          %s238 = sshll.u32 %s231, 4
          %s239 = int_to_ptr.vmem [resolvable:$true] %s238
          %244 = dma.hbm_to_vmem [thread:$0]  %s237, 256, %s239, %s228, 128, 128, 8
        $region40: #{tpu_custom_call.1} parent=35 // pred_fallthru
          _
      $region36: #{tpu_custom_call.1} parent=5 // pred_fallthru
        _
      %p245 = scmp.le.s32.totalorder 1, %s23
      %p246 = scmp.lt.s32.totalorder %s23, 3
      %p247 = pnand %p245, %p246
      %p248 = pneg %p247
      // Predicated region
      $region41: #{tpu_custom_call.1} parent=5 // pred_check
        _
      $region42: #{tpu_custom_call.1} parent=5 // pred_check_branch
        %250 = sbr.rel (%p247) target = $region44
      $region43: #{tpu_custom_call.1} parent=5 // pred_region
        %s251 = ssub.s32 %s23, 1
        %s252 = sand.u32 %s36, 1
        %s253 = scalar_lea.sflag [#allocation5], %s252
        %s254 = sand.u32 %s36, 1
        %s255 = smul.addr %s254, 16
        %s256 = scalar_lea.vmem [#allocation4], %s255
        // Predicated region
        $region45: #{tpu_custom_call.1} parent=43 // pred_check
          %p257 = pneg %p49
        $region46: #{tpu_custom_call.1} parent=43 // pred_check_branch
          %259 = sbr.rel (%p257) target = $region48
        $region47: #{tpu_custom_call.1} parent=43 // pred_region
          %260 = dma.done %s253, 256
        $region48: #{tpu_custom_call.1} parent=43 // pred_fallthru
          _
        // Predicated region
        $region49: #{tpu_custom_call.1} parent=43 // pred_check
          %p261 = pneg %p133
        $region50: #{tpu_custom_call.1} parent=43 // pred_check_branch
          %263 = sbr.rel (%p261) target = $region52
        $region51: #{tpu_custom_call.1} parent=43 // pred_region
          %264 = dma.done [#allocation7], 2048
        $region52: #{tpu_custom_call.1} parent=43 // pred_fallthru
          _
        %s265 = sand.u32 %s36, 1
        %s266 = scalar_lea.sflag [#allocation5], %s265
        %s267 = sand.u32 %s36, 1
        %s268 = smul.addr %s267, 16
        %s269 = scalar_lea.vmem [#allocation4], %s268
        %p270 = pneg %p49
        %p271 = pneg %p46
        %p272 = pneg %p70
        %p273 = pneg %p67
        %p274 = pneg %p91
        %p275 = pneg %p88
        %p276 = pneg %p112
        %p277 = pneg %p109
        %p278 = pneg %p133
        %p279 = pneg %p130
        %p280 = pneg %p154
        %p281 = pneg %p151
        %p282 = pneg %p180
        %p283 = pneg %p177
        %s284 = smul.u32 2, %s28
        %p285 = scmp.lt.s32.totalorder %s284, 3
        %s286 = scalar_select %p285, %s284, 3
        %s287 = smul.addr %s286, 8
        %s288 = scalar_lea.vmem %s7, %s287
        %s289 = smul.u32 2, %s28
        %s290 = smul.u32 2, %s28
        %p291 = scmp.lt.s32.totalorder %s290, 3
        %s292 = scalar_select %p291, %s290, 3
        %s293 = smul.addr %s292, 8
        %s294 = scalar_lea.vmem %s7, %s293
        %s295 = smul.u32 2, %s28
        %v296 = vld [vmem:[%s256] sm:$0xff]
        %v297 = vld [vmem:[%s256 + $0x8] sm:$0xff]
        %v298 = vld [vmem:[%s3] sm:$0xff]
        %v299 = vld [vmem:[%s3 + $0x8] sm:$0xff]
        %v300 = vld [vmem:[%s3 + $0x10] sm:$0xff]
        %v301 = vld [vmem:[%s3 + $0x18] sm:$0xff]
        %v302 = vld [vmem:[%s3 + $0x20] sm:$0xff]
        %v303 = vld [vmem:[%s3 + $0x28] sm:$0xff]
        %v304 = vld [vmem:[%s3 + $0x30] sm:$0xff]
        %v305 = vld [vmem:[%s3 + $0x38] sm:$0xff]
        %v306 = vld [vmem:[%s3 + $0x40] sm:$0xff]
        %v307 = vld [vmem:[%s3 + $0x48] sm:$0xff]
        %v308 = vld [vmem:[%s3 + $0x50] sm:$0xff]
        %v309 = vld [vmem:[%s3 + $0x58] sm:$0xff]
        %v310 = vld [vmem:[%s3 + $0x60] sm:$0xff]
        %v311 = vld [vmem:[%s3 + $0x68] sm:$0xff]
        %v312 = vld [vmem:[%s3 + $0x70] sm:$0xff]
        %v313 = vld [vmem:[%s3 + $0x78] sm:$0xff]
        %v314 = vld [vmem:[%s4] sm:$0x1]
        %v316 = vlaneseq
        %v317 = vshrl.u32 %v316, 7
        %v318 = vsub.s32 0, %v317
        %v319 = vrot.slane %v314, %v318
        %321 = vmatprep.subr.mxu0 0.0
        %322 = vmatpush1.msra.mxu0 %v313
        %323 = vmatprep.subr.mxu0 0.0
        %324 = vmatpush1.msra.mxu0 %v312
        %325 = vmatprep.subr.mxu0 0.0
        %326 = vmatpush1.msra.mxu0 %v311
        %327 = vmatprep.subr.mxu0 0.0
        %328 = vmatpush1.msra.mxu0 %v310
        %329 = vmatprep.subr.mxu0 0.0
        %330 = vmatpush1.msra.mxu0 %v309
        %331 = vmatprep.subr.mxu0 0.0
        %332 = vmatpush1.msra.mxu0 %v308
        %333 = vmatprep.subr.mxu0 0.0
        %334 = vmatpush1.msra.mxu0 %v307
        %335 = vmatprep.subr.mxu0 0.0
        %336 = vmatpush1.msra.mxu0 %v306
        %337 = vmatprep.subr.mxu0 0.0
        %338 = vmatpush1.msra.mxu0 %v305
        %339 = vmatprep.subr.mxu0 0.0
        %340 = vmatpush1.msra.mxu0 %v304
        %341 = vmatprep.subr.mxu0 0.0
        %342 = vmatpush1.msra.mxu0 %v303
        %343 = vmatprep.subr.mxu0 0.0
        %344 = vmatpush1.msra.mxu0 %v302
        %345 = vmatprep.subr.mxu0 0.0
        %346 = vmatpush1.msra.mxu0 %v301
        %347 = vmatprep.subr.mxu0 0.0
        %348 = vmatpush1.msra.mxu0 %v300
        %349 = vmatprep.subr.mxu0 0.0
        %350 = vmatpush1.msra.mxu0 %v299
        %351 = vmatprep.subr.mxu0 0.0
        %352 = vmatpush1.msra.mxu0 %v298
        %353 = vmatprep.subr.mxu0 0.0
        %354 = vmatpush2.msra.mxu0 0.0
        %355 = vmatprep.subr.mxu0 0.0
        %356 = vmatpush2.msra.mxu0 0.0
        %357 = vmatprep.subr.mxu0 0.0
        %358 = vmatpush2.msra.mxu0 0.0
        %359 = vmatprep.subr.mxu0 0.0
        %360 = vmatpush2.msra.mxu0 0.0
        %361 = vmatprep.subr.mxu0 0.0
        %362 = vmatpush2.msra.mxu0 0.0
        %363 = vmatprep.subr.mxu0 0.0
        %364 = vmatpush2.msra.mxu0 0.0
        %365 = vmatprep.subr.mxu0 0.0
        %366 = vmatpush2.msra.mxu0 0.0
        %367 = vmatprep.subr.mxu0 0.0
        %368 = vmatpush2.msra.mxu0 0.0
        %369 = vmatprep.subr.mxu0 0.0
        %370 = vmatpush2.msra.mxu0 0.0
        %371 = vmatprep.subr.mxu0 0.0
        %372 = vmatpush2.msra.mxu0 0.0
        %373 = vmatprep.subr.mxu0 0.0
        %374 = vmatpush2.msra.mxu0 0.0
        %375 = vmatprep.subr.mxu0 0.0
        %376 = vmatpush2.msra.mxu0 0.0
        %377 = vmatprep.subr.mxu0 0.0
        %378 = vmatpush2.msra.mxu0 0.0
        %379 = vmatprep.subr.mxu0 0.0
        %380 = vmatpush2.msra.mxu0 0.0
        %381 = vmatprep.subr.mxu0 0.0
        %382 = vmatpush2.msra.mxu0 0.0
        %383 = vmatprep.subr.mxu0 0.0
        %384 = vmatpush2.msra.mxu0 0.0
        %385 = vmatprep.mubr.f32.mxu0 0.0
        %386 = vmatmul.mubr.f32.gmra.mxu0 %v296
        %v387 = vpop.f32.mrf.mxu0
        %v388 = vadd.f32 %v319, %v387
        %v389 = vpop.f32.mrf.mxu0
        %390 = vmatprep.mubr.f32.mxu0 0.0
        %391 = vmatmul.mubr.f32.gmra.mxu0 %v297
        %v392 = vpop.f32.mrf.mxu0
        %v393 = vadd.f32 %v319, %v392
        %v394 = vpop.f32.mrf.mxu0
        %395 = vdwg.mxu0
        %v396 = vld [vmem:[%s2] sm:$0x1]
        %vm397 = vcmp.lt.s32.totalorder %v396, 3
        %vm398 = vcmp.lt.s32.totalorder %v396, 6
        %v399 = vsub.s32 %v396, 3
        %v400 = vsel %vm397, %v396, %v399
        %401 = vrot.lane.b32.xlu0 %v388, 1
        %v402 = vpop.permute.xlu0 %401
        %403 = vrot.lane.b32.xlu0 %v393, 1
        %v404 = vpop.permute.xlu0 %403
        %405 = vrot.lane.b32.xlu0 %v388, 127
        %v406 = vpop.permute.xlu0 %405
        %407 = vrot.lane.b32.xlu0 %v393, 127
        %v408 = vpop.permute.xlu0 %407
        %vm409 = vcmp.ge.s32.totalorder %v400, 1
        %v410 = vmax.f32 %v388, %v402
        %v411 = vmax.f32 %v393, %v404
        %v412 = vsel %vm409, 1, 0
        %v413 = vlaneseq
        %v414 = vshrl.u32 %v413, 7
        %v415 = vsub.s32 0, %v414
        %v416 = vrot.slane %v412, %v415
        %vm417 = vcmp.eq.s32.totalorder %v416, 1
        %v418 = vsel %vm417, %v410, %v388
        %v419 = vsel %vm417, %v411, %v393
        %v420 = vadd.s32 %v400, 1
        %vm421 = vcmp.lt.s32.totalorder %v420, 3
        %v422 = vmax.f32 %v418, %v406
        %v423 = vmax.f32 %v419, %v408
        %v424 = vsel %vm421, 1, 0
        %v425 = vlaneseq
        %v426 = vshrl.u32 %v425, 7
        %v427 = vsub.s32 0, %v426
        %v428 = vrot.slane %v424, %v427
        %vm429 = vcmp.eq.s32.totalorder %v428, 1
        %v430 = vsel %vm429, %v422, %v418
        %v431 = vsel %vm429, %v423, %v419
        %432 = vrot.lane.b32.xlu0 %v388, 2
        %v433 = vpop.permute.xlu0 %432
        %434 = vrot.lane.b32.xlu0 %v393, 2
        %v435 = vpop.permute.xlu0 %434
        %436 = vrot.lane.b32.xlu0 %v388, 126
        %v437 = vpop.permute.xlu0 %436
        %438 = vrot.lane.b32.xlu0 %v393, 126
        %v439 = vpop.permute.xlu0 %438
        %vm440 = vcmp.ge.s32.totalorder %v400, 2
        %v441 = vmax.f32 %v430, %v433
        %v442 = vmax.f32 %v431, %v435
        %v443 = vsel %vm440, 1, 0
        %v444 = vlaneseq
        %v445 = vshrl.u32 %v444, 7
        %v446 = vsub.s32 0, %v445
        %v447 = vrot.slane %v443, %v446
        %vm448 = vcmp.eq.s32.totalorder %v447, 1
        %v449 = vsel %vm448, %v441, %v430
        %v450 = vsel %vm448, %v442, %v431
        %v451 = vadd.s32 %v400, 2
        %vm452 = vcmp.lt.s32.totalorder %v451, 3
        %v453 = vmax.f32 %v449, %v437
        %v454 = vmax.f32 %v450, %v439
        %v455 = vsel %vm452, 1, 0
        %v456 = vlaneseq
        %v457 = vshrl.u32 %v456, 7
        %v458 = vsub.s32 0, %v457
        %v459 = vrot.slane %v455, %v458
        %vm460 = vcmp.eq.s32.totalorder %v459, 1
        %v461 = vsel %vm460, %v453, %v449
        %v462 = vsel %vm460, %v454, %v450
        %v463 = vsub.f32 %v388, %v461
        %v464 = vsub.f32 %v393, %v462
        %v465 = vmul.f32 %v463, 1.442695
        %v466 = vpow.pop %v465
        %v467 = vmul.f32 %v464, 1.442695
        %v468 = vpow.pop %v467
        %469 = vrot.lane.b32.xlu0 %v466, 1
        %v470 = vpop.permute.xlu0 %469
        %471 = vrot.lane.b32.xlu0 %v468, 1
        %v472 = vpop.permute.xlu0 %471
        %473 = vrot.lane.b32.xlu0 %v466, 127
        %v474 = vpop.permute.xlu0 %473
        %475 = vrot.lane.b32.xlu0 %v468, 127
        %v476 = vpop.permute.xlu0 %475
        %v477 = vsel %vm417, %v470, 0.0
        %v478 = vsel %vm417, %v472, 0.0
        %v479 = vadd.f32 %v466, %v477
        %v480 = vadd.f32 %v468, %v478
        %v481 = vsel %vm429, %v474, 0.0
        %v482 = vsel %vm429, %v476, 0.0
        %v483 = vadd.f32 %v479, %v481
        %v484 = vadd.f32 %v480, %v482
        %485 = vrot.lane.b32.xlu0 %v466, 2
        %v486 = vpop.permute.xlu0 %485
        %487 = vrot.lane.b32.xlu0 %v468, 2
        %v488 = vpop.permute.xlu0 %487
        %489 = vrot.lane.b32.xlu0 %v466, 126
        %v490 = vpop.permute.xlu0 %489
        %491 = vrot.lane.b32.xlu0 %v468, 126
        %v492 = vpop.permute.xlu0 %491
        %v493 = vsel %vm448, %v486, 0.0
        %v494 = vsel %vm448, %v488, 0.0
        %v495 = vadd.f32 %v483, %v493
        %v496 = vadd.f32 %v484, %v494
        %v497 = vsel %vm460, %v490, 0.0
        %v498 = vsel %vm460, %v492, 0.0
        %v499 = vadd.f32 %v495, %v497
        %v500 = vadd.f32 %v496, %v498
        %v501 = vrcp.pop %v499
        %v502 = vrcp.pop %v500
        %v503 = vmul.f32 %v466, %v501
        %v504 = vmul.f32 %v468, %v502
        %v505 = vsel %vm398, 1, 0
        %v506 = vlaneseq
        %v507 = vshrl.u32 %v506, 7
        %v508 = vsub.s32 0, %v507
        %v509 = vrot.slane %v505, %v508
        %vm510 = vcmp.eq.s32.totalorder %v509, 1
        %v511 = vsel %vm510, %v503, %v388
        %v512 = vsel %vm510, %v504, %v393
        %v513 = vld [vmem:[#allocation6] sm:$0xff]
        %v514 = vld [vmem:[#allocation6 + $0x8] sm:$0xff]
        %v515 = vld [vmem:[#allocation6 + $0x10] sm:$0xff]
        %v516 = vld [vmem:[#allocation6 + $0x18] sm:$0xff]
        %v517 = vld [vmem:[#allocation6 + $0x20] sm:$0xff]
        %v518 = vld [vmem:[#allocation6 + $0x28] sm:$0xff]
        %v519 = vld [vmem:[#allocation6 + $0x30] sm:$0xff]
        %v520 = vld [vmem:[#allocation6 + $0x38] sm:$0xff]
        %v521 = vld [vmem:[#allocation6 + $0x40] sm:$0xff]
        %v522 = vld [vmem:[#allocation6 + $0x48] sm:$0xff]
        %v523 = vld [vmem:[#allocation6 + $0x50] sm:$0xff]
        %v524 = vld [vmem:[#allocation6 + $0x58] sm:$0xff]
        %v525 = vld [vmem:[#allocation6 + $0x60] sm:$0xff]
        %v526 = vld [vmem:[#allocation6 + $0x68] sm:$0xff]
        %v527 = vld [vmem:[#allocation6 + $0x70] sm:$0xff]
        %v528 = vld [vmem:[#allocation6 + $0x78] sm:$0xff]
        %529 = vmatprep.subr.mxu0 0.0
        %530 = vmatpush1.msra.mxu0 %v528
        %531 = vmatprep.subr.mxu0 0.0
        %532 = vmatpush1.msra.mxu0 %v527
        %533 = vmatprep.subr.mxu0 0.0
        %534 = vmatpush1.msra.mxu0 %v526
        %535 = vmatprep.subr.mxu0 0.0
        %536 = vmatpush1.msra.mxu0 %v525
        %537 = vmatprep.subr.mxu0 0.0
        %538 = vmatpush1.msra.mxu0 %v524
        %539 = vmatprep.subr.mxu0 0.0
        %540 = vmatpush1.msra.mxu0 %v523
        %541 = vmatprep.subr.mxu0 0.0
        %542 = vmatpush1.msra.mxu0 %v522
        %543 = vmatprep.subr.mxu0 0.0
        %544 = vmatpush1.msra.mxu0 %v521
        %545 = vmatprep.subr.mxu0 0.0
        %546 = vmatpush1.msra.mxu0 %v520
        %547 = vmatprep.subr.mxu0 0.0
        %548 = vmatpush1.msra.mxu0 %v519
        %549 = vmatprep.subr.mxu0 0.0
        %550 = vmatpush1.msra.mxu0 %v518
        %551 = vmatprep.subr.mxu0 0.0
        %552 = vmatpush1.msra.mxu0 %v517
        %553 = vmatprep.subr.mxu0 0.0
        %554 = vmatpush1.msra.mxu0 %v516
        %555 = vmatprep.subr.mxu0 0.0
        %556 = vmatpush1.msra.mxu0 %v515
        %557 = vmatprep.subr.mxu0 0.0
        %558 = vmatpush1.msra.mxu0 %v514
        %559 = vmatprep.subr.mxu0 0.0
        %560 = vmatpush1.msra.mxu0 %v513
        %561 = vmatprep.subr.mxu0 0.0
        %562 = vmatpush2.msra.mxu0 0.0
        %563 = vmatprep.subr.mxu0 0.0
        %564 = vmatpush2.msra.mxu0 0.0
        %565 = vmatprep.subr.mxu0 0.0
        %566 = vmatpush2.msra.mxu0 0.0
        %567 = vmatprep.subr.mxu0 0.0
        %568 = vmatpush2.msra.mxu0 0.0
        %569 = vmatprep.subr.mxu0 0.0
        %570 = vmatpush2.msra.mxu0 0.0
        %571 = vmatprep.subr.mxu0 0.0
        %572 = vmatpush2.msra.mxu0 0.0
        %573 = vmatprep.subr.mxu0 0.0
        %574 = vmatpush2.msra.mxu0 0.0
        %575 = vmatprep.subr.mxu0 0.0
        %576 = vmatpush2.msra.mxu0 0.0
        %577 = vmatprep.subr.mxu0 0.0
        %578 = vmatpush2.msra.mxu0 0.0
        %579 = vmatprep.subr.mxu0 0.0
        %580 = vmatpush2.msra.mxu0 0.0
        %581 = vmatprep.subr.mxu0 0.0
        %582 = vmatpush2.msra.mxu0 0.0
        %583 = vmatprep.subr.mxu0 0.0
        %584 = vmatpush2.msra.mxu0 0.0
        %585 = vmatprep.subr.mxu0 0.0
        %586 = vmatpush2.msra.mxu0 0.0
        %587 = vmatprep.subr.mxu0 0.0
        %588 = vmatpush2.msra.mxu0 0.0
        %589 = vmatprep.subr.mxu0 0.0
        %590 = vmatpush2.msra.mxu0 0.0
        %591 = vmatprep.subr.mxu0 0.0
        %592 = vmatpush2.msra.mxu0 0.0
        %593 = vmatprep.mubr.f32.mxu0 0.0
        %594 = vmatmul.mubr.f32.gmra.mxu0 %v511
        %v595 = vpop.f32.mrf.mxu0
        %v596 = vadd.f32 0.0, %v595
        %v597 = vpop.f32.mrf.mxu0
        %598 = vmatprep.mubr.f32.mxu0 0.0
        %599 = vmatmul.mubr.f32.gmra.mxu0 %v512
        %v600 = vpop.f32.mrf.mxu0
        %v601 = vadd.f32 0.0, %v600
        %v602 = vpop.f32.mrf.mxu0
        %603 = vdwg.mxu0
        %604 = vrot.lane.b32.xlu0 %v596, 127
        %v605 = vpop.permute.xlu0 %604
        %606 = vrot.lane.b32.xlu0 %v601, 127
        %v607 = vpop.permute.xlu0 %606
        %608 = vrot.lane.b32.xlu0 %v596, 126
        %v609 = vpop.permute.xlu0 %608
        %610 = vrot.lane.b32.xlu0 %v601, 126
        %v611 = vpop.permute.xlu0 %610
        %v612 = vmax.f32 %v596, %v605
        %v613 = vmax.f32 %v601, %v607
        %v614 = vmax.f32 %v612, %v609
        %v615 = vmax.f32 %v613, %v611
        %vm616 = vcmp.eq.f32.partialorder %v605, %v614
        %vm617 = vcmp.eq.f32.partialorder %v607, %v615
        %v618 = vsel %vm616, 1, 2
        %v619 = vsel %vm617, 1, 2
        %vm620 = vcmp.eq.f32.partialorder %v596, %v614
        %vm621 = vcmp.eq.f32.partialorder %v601, %v615
        %v622 = vsel %vm620, 0, %v618
        %v623 = vsel %vm621, 0, %v619
        %v624 = vcvt.s32.f32 %v622
        %v625 = vcvt.s32.f32 %v623
        %v626 = vld [vmem:[%s6] sm:$0xff]
        %v627 = vld [vmem:[%s6 + $0x8] sm:$0xff]
        %v628 = vld [vmem:[%s6 + $0x10] sm:$0xff]
        %v629 = vld [vmem:[%s6 + $0x18] sm:$0xff]
        %v630 = vld [vmem:[%s6 + $0x20] sm:$0xff]
        %v631 = vld [vmem:[%s6 + $0x28] sm:$0xff]
        %v632 = vld [vmem:[%s6 + $0x30] sm:$0xff]
        %v633 = vld [vmem:[%s6 + $0x38] sm:$0xff]
        %v634 = vld [vmem:[%s6 + $0x40] sm:$0xff]
        %v635 = vld [vmem:[%s6 + $0x48] sm:$0xff]
        %v636 = vld [vmem:[%s6 + $0x50] sm:$0xff]
        %v637 = vld [vmem:[%s6 + $0x58] sm:$0xff]
        %v638 = vld [vmem:[%s6 + $0x60] sm:$0xff]
        %v639 = vld [vmem:[%s6 + $0x68] sm:$0xff]
        %v640 = vld [vmem:[%s6 + $0x70] sm:$0xff]
        %v641 = vld [vmem:[%s6 + $0x78] sm:$0xff]
        %642 = vmatprep.subr.mxu0 0.0
        %643 = vmatpush1.msra.mxu0 %v641
        %644 = vmatprep.subr.mxu0 0.0
        %645 = vmatpush1.msra.mxu0 %v640
        %646 = vmatprep.subr.mxu0 0.0
        %647 = vmatpush1.msra.mxu0 %v639
        %648 = vmatprep.subr.mxu0 0.0
        %649 = vmatpush1.msra.mxu0 %v638
        %650 = vmatprep.subr.mxu0 0.0
        %651 = vmatpush1.msra.mxu0 %v637
        %652 = vmatprep.subr.mxu0 0.0
        %653 = vmatpush1.msra.mxu0 %v636
        %654 = vmatprep.subr.mxu0 0.0
        %655 = vmatpush1.msra.mxu0 %v635
        %656 = vmatprep.subr.mxu0 0.0
        %657 = vmatpush1.msra.mxu0 %v634
        %658 = vmatprep.subr.mxu0 0.0
        %659 = vmatpush1.msra.mxu0 %v633
        %660 = vmatprep.subr.mxu0 0.0
        %661 = vmatpush1.msra.mxu0 %v632
        %662 = vmatprep.subr.mxu0 0.0
        %663 = vmatpush1.msra.mxu0 %v631
        %664 = vmatprep.subr.mxu0 0.0
        %665 = vmatpush1.msra.mxu0 %v630
        %666 = vmatprep.subr.mxu0 0.0
        %667 = vmatpush1.msra.mxu0 %v629
        %668 = vmatprep.subr.mxu0 0.0
        %669 = vmatpush1.msra.mxu0 %v628
        %670 = vmatprep.subr.mxu0 0.0
        %671 = vmatpush1.msra.mxu0 %v627
        %672 = vmatprep.subr.mxu0 0.0
        %673 = vmatpush1.msra.mxu0 %v626
        %674 = vmatprep.subr.mxu0 0.0
        %675 = vmatpush2.msra.mxu0 0.0
        %676 = vmatprep.subr.mxu0 0.0
        %677 = vmatpush2.msra.mxu0 0.0
        %678 = vmatprep.subr.mxu0 0.0
        %679 = vmatpush2.msra.mxu0 0.0
        %680 = vmatprep.subr.mxu0 0.0
        %681 = vmatpush2.msra.mxu0 0.0
        %682 = vmatprep.subr.mxu0 0.0
        %683 = vmatpush2.msra.mxu0 0.0
        %684 = vmatprep.subr.mxu0 0.0
        %685 = vmatpush2.msra.mxu0 0.0
        %686 = vmatprep.subr.mxu0 0.0
        %687 = vmatpush2.msra.mxu0 0.0
        %688 = vmatprep.subr.mxu0 0.0
        %689 = vmatpush2.msra.mxu0 0.0
        %690 = vmatprep.subr.mxu0 0.0
        %691 = vmatpush2.msra.mxu0 0.0
        %692 = vmatprep.subr.mxu0 0.0
        %693 = vmatpush2.msra.mxu0 0.0
        %694 = vmatprep.subr.mxu0 0.0
        %695 = vmatpush2.msra.mxu0 0.0
        %696 = vmatprep.subr.mxu0 0.0
        %697 = vmatpush2.msra.mxu0 0.0
        %698 = vmatprep.subr.mxu0 0.0
        %699 = vmatpush2.msra.mxu0 0.0
        %700 = vmatprep.subr.mxu0 0.0
        %701 = vmatpush2.msra.mxu0 0.0
        %702 = vmatprep.subr.mxu0 0.0
        %703 = vmatpush2.msra.mxu0 0.0
        %704 = vmatprep.subr.mxu0 0.0
        %705 = vmatpush2.msra.mxu0 0.0
        %706 = vmatprep.mubr.f32.mxu0 0.0
        %707 = vmatmul.mubr.f32.gmra.mxu0 %v624
        %v708 = vpop.f32.mrf.mxu0
        %v709 = vadd.f32 0.0, %v708
        %v710 = vpop.f32.mrf.mxu0
        %711 = vmatprep.mubr.f32.mxu0 0.0
        %712 = vmatmul.mubr.f32.gmra.mxu0 %v625
        %v713 = vpop.f32.mrf.mxu0
        %v714 = vadd.f32 0.0, %v713
        %v715 = vpop.f32.mrf.mxu0
        %716 = vdwg.mxu0
        %v717 = vcvt.f32.s32.to.zero.pseudo %v709
        %v718 = vcvt.f32.s32.to.zero.pseudo %v714
        %vm719 = vcmp.eq.s32.totalorder %v717, 0
        %vm720 = vcmp.eq.s32.totalorder %v718, 0
        %s721 = sld [smem:[#allocation3]]
        %v722 = vstv %s721
        %v723 = vsel %vm719, %v722, 0
        %v724 = vsel %vm720, %v722, 0
        %vm725 = vcmp.eq.s32.totalorder %v717, 1
        %vm726 = vcmp.eq.s32.totalorder %v718, 1
        %s727 = sld [smem:[#allocation3 + $0x1]]
        %v728 = vstv %s727
        %v729 = vsel %vm725, %v728, %v723
        %v730 = vsel %vm726, %v728, %v724
        %vm731 = vcmp.eq.s32.totalorder %v717, 2
        %vm732 = vcmp.eq.s32.totalorder %v718, 2
        %s733 = sld [smem:[#allocation3 + $0x2]]
        %v734 = vstv %s733
        %v735 = vsel %vm731, %v734, %v729
        %v736 = vsel %vm732, %v734, %v730
        %vm737 = vcmask 64512
        %738 = vst.msk [vmem:[%s294] sm:$0xff] %vm737, %v735
        %739 = vst.msk [vmem:[%s294 + $0x8] sm:$0xff] %vm737, %v736
        %s740 = smul.u32 2, %s28
        %p741 = scmp.lt.s32.totalorder %s740, 3
        %s742 = scalar_select %p741, %s740, 3
        %s743 = smul.addr %s742, 8
        %s744 = scalar_lea.vmem %s7, %s743
        // Predicated region
        $region53: #{tpu_custom_call.1} parent=43 // pred_check
          %p745 = pneg %p177
        $region54: #{tpu_custom_call.1} parent=43 // pred_check_branch
          %747 = sbr.rel (%p745) target = $region56
        $region55: #{tpu_custom_call.1} parent=43 // pred_region
          %s748 = smul.u32 2, %s28
        $region56: #{tpu_custom_call.1} parent=43 // pred_fallthru
          _
      $region44: #{tpu_custom_call.1} parent=5 // pred_fallthru
        _
      %p749 = scmp.le.s32.totalorder 2, %s23
      // Predicated region
      $region57: #{tpu_custom_call.1} parent=5 // pred_check
        %p750 = pneg %p749
      $region58: #{tpu_custom_call.1} parent=5 // pred_check_branch
        %752 = sbr.rel (%p750) target = $region60
      $region59: #{tpu_custom_call.1} parent=5 // pred_region
        %s753 = ssub.s32 %s23, 2
        // Predicated region
        $region61: #{tpu_custom_call.1} parent=59 // pred_check
          %p754 = pneg %p183
        $region62: #{tpu_custom_call.1} parent=59 // pred_check_branch
          %756 = sbr.rel (%p754) target = $region64
        $region63: #{tpu_custom_call.1} parent=59 // pred_region
          %s757 = smul.u32 2, %s29
          %p758 = scmp.lt.s32.totalorder %s757, 3
          %s759 = scalar_select %p758, %s757, 3
          %s760 = smul.addr %s759, 8
          %s761 = scalar_lea.vmem %s7, %s760
        $region64: #{tpu_custom_call.1} parent=59 // pred_fallthru
          _
      $region60: #{tpu_custom_call.1} parent=5 // pred_fallthru
        _
    $region6: #{tpu_custom_call.1} parent=1 // loop_footer
      %s27 = sadd.s32 1, %s23
    $region7: #{tpu_custom_call.1} parent=1 // loop_footer_branch
      %22 = sbr.rel target = $region3
    $region8: #{tpu_custom_call.1} parent=1 // loop_exit
      _
    %762 = vsyncpa [#allocation5], 1
    %s763 = scalar_lea.sflag [#allocation5], 1
    %764 = vsyncpa %s763, 1
    %765 = vsyncpa [#allocation7], 1

</llo_original>
